<compile_context>
chip_gen: v7x
topology: tpu7x:2x2x1
jax: 0.10.0
libtpu: 0.0.40
codegen_flags: <defaults>
</compile_context>

<pallas_src>
import functools

import jax
import jax.numpy as jnp
from jax.experimental import pallas as pl
from jax.experimental.pallas import tpu as pltpu

LANE = 128
SUBLANE = 8


def _round_up(x: int, m: int) -> int:
    return ((x + m - 1) // m) * m


def _cdiv(a: int, b: int) -> int:
    return -(-a // b)


def _pad_to(arr, shape):
    pads = [(0, t - s) for s, t in zip(arr.shape, shape)]
    if all(p == (0, 0) for p in pads):
        return arr
    return jnp.pad(arr, pads)


def actor_mlp_kernel(obs_ref, w1_ref, b1_ref, w2_ref, b2_ref, w3_ref, b3_ref, out_ref):
    """Fused 3-layer MLP on one batch tile.

    Weight refs are bf16 (pre-cast in the wrapper); matmuls run on the MXU
    with f32 accumulation; bias add / ReLU / tanh stay f32 (v5e-safe).
    """
    x = obs_ref[...].astype(jnp.bfloat16)          # no-op if obs already bf16
    h1 = jnp.dot(x, w1_ref[...], preferred_element_type=jnp.float32) + b1_ref[...]
    h1 = jnp.maximum(h1, 0.0).astype(jnp.bfloat16)
    h2 = jnp.dot(h1, w2_ref[...], preferred_element_type=jnp.float32) + b2_ref[...]
    h2 = jnp.maximum(h2, 0.0).astype(jnp.bfloat16)
    a = jnp.dot(h2, w3_ref[...], preferred_element_type=jnp.float32) + b3_ref[...]
    out_ref[...] = jnp.tanh(a)


@functools.partial(jax.jit, static_argnames=("block_batch",))
def actor_forward(obs, w1, b1, w2, b2, w3, b3, *, block_batch=1024):
    """obs: (batch, dim_obs) f32/bf16; weights (dim_in, dim_out); biases (1, dim_out)."""
    batch, dim_obs = obs.shape
    dim_h1 = w1.shape[1]
    dim_h2 = w2.shape[1]
    dim_action = w3.shape[1]

    # Only the hidden dims are lane-padded (tiny, resident weights); obs and
    # action dims stay at their true sizes so no extra HBM traffic is created.
    p_h1 = _round_up(dim_h1, LANE)
    p_h2 = _round_up(dim_h2, LANE)

    # Batch tiling: pad only to an 8-row quantum per tile, not to a full
    # block_batch multiple.  Force >=2 grid steps when there is enough work so
    # the "parallel" axis can span both v7x TensorCores.
    pb8 = _round_up(batch, SUBLANE)
    num_tiles = _cdiv(pb8, block_batch)
    if num_tiles == 1 and pb8 >= 256:
        num_tiles = 2
    tb = _round_up(_cdiv(pb8, num_tiles), SUBLANE)
    p_batch = tb * num_tiles

    obs_p = _pad_to(obs, (p_batch, dim_obs))

    wdt = jnp.bfloat16
    w1_p = _pad_to(w1, (dim_obs, p_h1)).astype(wdt)
    b1_p = _pad_to(b1.reshape(1, -1), (1, p_h1))
    w2_p = _pad_to(w2, (p_h1, p_h2)).astype(wdt)
    b2_p = _pad_to(b2.reshape(1, -1), (1, p_h2))
    w3_p = _pad_to(w3, (p_h2, dim_action)).astype(wdt)
    b3_p = b3.reshape(1, dim_action)

    params_p = (w1_p, b1_p, w2_p, b2_p, w3_p, b3_p)

    def resident(shape):
        # Same block every grid step -> stays in VMEM, no per-step DMA.
        return pl.BlockSpec(shape, lambda i: (0, 0))

    # Advisory cost estimate so XLA schedules surrounding ops around the call.
    flops = 2 * p_batch * (dim_obs * p_h1 + p_h1 * p_h2 + p_h2 * dim_action)
    bytes_accessed = (
        obs_p.size * obs_p.dtype.itemsize
        + sum(a.size * a.dtype.itemsize for a in params_p)
        + p_batch * dim_action * 4
    )
    cost = pl.CostEstimate(
        flops=flops,
        transcendentals=p_batch * dim_action,
        bytes_accessed=bytes_accessed,
    )

    # Explicit VMEM budget: resident (double-buffered) params + 2x-buffered
    # obs/out tiles, with generous headroom, capped below v7x's 64 MiB.
    param_bytes = sum(a.size * a.dtype.itemsize for a in params_p)
    tile_bytes = tb * dim_obs * obs_p.dtype.itemsize + tb * dim_action * 4
    vmem_need = 2 * (param_bytes + tile_bytes)
    vmem_limit = int(min(max(2 * vmem_need, 32 << 20), 64 << 20))

    out = pl.pallas_call(
        actor_mlp_kernel,
        out_shape=jax.ShapeDtypeStruct((p_batch, dim_action), jnp.float32),
        grid_spec=pl.GridSpec(
            grid=(num_tiles,),
            in_specs=[
                pl.BlockSpec((tb, dim_obs), lambda i: (i, 0)),
                resident(w1_p.shape), resident(b1_p.shape),
                resident(w2_p.shape), resident(b2_p.shape),
                resident(w3_p.shape), resident(b3_p.shape),
            ],
            out_specs=pl.BlockSpec((tb, dim_action), lambda i: (i, 0)),
        ),
        compiler_params=pltpu.CompilerParams(
            dimension_semantics=("parallel",),  # v7x: shard batch tiles over 2 TCs
            vmem_limit_bytes=vmem_limit,
        ),
        cost_estimate=cost,
    )(obs_p, *params_p)

    if p_batch != batch:
        out = out[:batch]
    return out


def xavier_uniform(key, dim_in, dim_out):
    # PyTorch xavier_uniform_ on weight of shape (out, in): bound = sqrt(6/(in+out)).
    # We store the transposed (in, out) weight directly; same distribution.
    bound = jnp.sqrt(6.0 / (dim_in + dim_out))
    return jax.random.uniform(
        key, (dim_in, dim_out), dtype=jnp.float32, minval=-bound, maxval=bound
    )


def init_actor_params(key, dim_obs, dim_action, dims_hidden=(64, 64)):
    n_neurons = (dim_obs,) + tuple(dims_hidden) + (dim_action,)
    keys = jax.random.split(key, len(n_neurons) - 1)
    params = []
    for k, (d_in, d_out) in zip(keys, zip(n_neurons[:-1], n_neurons[1:])):
        w = xavier_uniform(k, d_in, d_out)
        b = jnp.zeros((1, d_out), dtype=jnp.float32)
        params.append((w, b))
    return params


def reference_forward_f32(obs, params):
    x = obs
    for w, b in params[:-1]:
        x = jnp.maximum(x @ w + b, 0.0)
    w, b = params[-1]
    return jnp.tanh(x @ w + b)


def reference_forward_bf16(obs, params):
    # Mirrors the kernel's numerics: bf16 matmul operands, f32 accumulation,
    # f32 element-wise math.
    x = obs
    for w, b in params[:-1]:
        x = jnp.maximum(
            jnp.dot(x.astype(jnp.bfloat16), w.astype(jnp.bfloat16),
                    preferred_element_type=jnp.float32) + b, 0.0)
    w, b = params[-1]
    return jnp.tanh(
        jnp.dot(x.astype(jnp.bfloat16), w.astype(jnp.bfloat16),
                preferred_element_type=jnp.float32) + b)


def _check(batch, dim_obs, dim_action, dims_hidden, k_obs, k_params):
    obs = jax.random.normal(k_obs, (batch, dim_obs), dtype=jnp.float32)
    params = init_actor_params(k_params, dim_obs, dim_action, dims_hidden)
    (w1, b1), (w2, b2), (w3, b3) = params

    out = jax.block_until_ready(actor_forward(obs, w1, b1, w2, b2, w3, b3))

    ref_bf16 = reference_forward_bf16(obs, params)
    ref_f32 = reference_forward_f32(obs, params)

    assert out.shape == (batch, dim_action)
    assert out.dtype == jnp.float32
    # Tight check against a numerically-matched (bf16-operand) reference ...
    assert jnp.allclose(out, ref_bf16, atol=1e-4, rtol=1e-4), "mismatch vs bf16 reference"
    # ... and a loose sanity check against the pure-f32 PyTorch-equivalent reference.
    assert jnp.allclose(out, ref_f32, atol=5e-2, rtol=5e-2), "mismatch vs f32 reference"


if __name__ == "__main__":
    key = jax.random.PRNGKey(0)
    k_obs, k_params, k_obs2 = jax.random.split(key, 3)

    # Small canonical shapes (module default hidden sizes).
    _check(batch=8, dim_obs=16, dim_action=4, dims_hidden=(64, 64),
           k_obs=k_obs, k_params=k_params)
    # Non-multiple batch exercising the 2-tile / row-padding path.
    _check(batch=300, dim_obs=16, dim_action=4, dims_hidden=(64, 64),
           k_obs=k_obs2, k_params=k_params)

    print("KERNEL_OK")
</pallas_src>

<mosaic_0001>
module attributes {stable_mosaic.version = 11 : i64} {
  func.func @actor_mlp_kernel(%arg0: i32, %arg1: memref<8x16xf32, #tpu.memory_space<vmem>>, %arg2: memref<16x128xbf16, #tpu.memory_space<vmem>>, %arg3: memref<1x128xf32, #tpu.memory_space<vmem>>, %arg4: memref<128x128xbf16, #tpu.memory_space<vmem>>, %arg5: memref<1x128xf32, #tpu.memory_space<vmem>>, %arg6: memref<128x4xbf16, #tpu.memory_space<vmem>>, %arg7: memref<1x4xf32, #tpu.memory_space<vmem>>, %arg8: memref<8x4xf32, #tpu.memory_space<vmem>>) attributes {dimension_semantics = [#tpu.dimension_semantics<parallel>], iteration_bounds = array<i64: 1>, scalar_prefetch = 0 : i64, scratch_operands = 0 : i64, tpu.core_type = #tpu.core_type<tc>, window_params = [{transform_indices = @transform_0, window_bounds = array<i64: 8, 16>}, {pipeline_mode = #tpu.pipeline_mode<synchronous>, transform_indices = @transform_1, window_bounds = array<i64: 16, 128>}, {pipeline_mode = #tpu.pipeline_mode<synchronous>, transform_indices = @transform_2, window_bounds = array<i64: 1, 128>}, {pipeline_mode = #tpu.pipeline_mode<synchronous>, transform_indices = @transform_3, window_bounds = array<i64: 128, 128>}, {pipeline_mode = #tpu.pipeline_mode<synchronous>, transform_indices = @transform_4, window_bounds = array<i64: 1, 128>}, {pipeline_mode = #tpu.pipeline_mode<synchronous>, transform_indices = @transform_5, window_bounds = array<i64: 128, 4>}, {pipeline_mode = #tpu.pipeline_mode<synchronous>, transform_indices = @transform_6, window_bounds = array<i64: 1, 4>}, {transform_indices = @transform_7, window_bounds = array<i64: 8, 4>}]} {
    %c0 = arith.constant 0 : index
    %c0_0 = arith.constant 0 : index
    %0 = vector.load %arg1[%c0, %c0_0] : memref<8x16xf32, #tpu.memory_space<vmem>>, vector<8x16xf32>
    %1 = arith.truncf %0 : vector<8x16xf32> to vector<8x16xbf16>
    %c0_1 = arith.constant 0 : index
    %c0_2 = arith.constant 0 : index
    %2 = vector.load %arg2[%c0_1, %c0_2] : memref<16x128xbf16, #tpu.memory_space<vmem>>, vector<16x128xbf16>
    %cst = arith.constant dense<0.000000e+00> : vector<8x128xf32>
    %3 = tpu.matmul %1, %2, %cst {dimension_numbers = #tpu.dot_dimension_numbers<[1], [0], [0], [1], [0, 0, 1, 1], [], []>} : vector<8x16xbf16>, vector<16x128xbf16>, vector<8x128xf32> -> vector<8x128xf32>
    %c0_3 = arith.constant 0 : index
    %c0_4 = arith.constant 0 : index
    %4 = vector.load %arg3[%c0_3, %c0_4] : memref<1x128xf32, #tpu.memory_space<vmem>>, vector<1x128xf32>
    %5 = vector.broadcast %4 : vector<1x128xf32> to vector<8x128xf32>
    %6 = arith.addf %3, %5 : vector<8x128xf32>
    %cst_5 = arith.constant 0.000000e+00 : f32
    %7 = vector.broadcast %cst_5 : f32 to vector<8x128xf32>
    %8 = arith.maximumf %6, %7 : vector<8x128xf32>
    %9 = arith.truncf %8 : vector<8x128xf32> to vector<8x128xbf16>
    %c0_6 = arith.constant 0 : index
    %c0_7 = arith.constant 0 : index
    %10 = vector.load %arg4[%c0_6, %c0_7] : memref<128x128xbf16, #tpu.memory_space<vmem>>, vector<128x128xbf16>
    %cst_8 = arith.constant dense<0.000000e+00> : vector<8x128xf32>
    %11 = tpu.matmul %9, %10, %cst_8 {dimension_numbers = #tpu.dot_dimension_numbers<[1], [0], [0], [1], [0, 0, 1, 1], [], []>} : vector<8x128xbf16>, vector<128x128xbf16>, vector<8x128xf32> -> vector<8x128xf32>
    %c0_9 = arith.constant 0 : index
    %c0_10 = arith.constant 0 : index
    %12 = vector.load %arg5[%c0_9, %c0_10] : memref<1x128xf32, #tpu.memory_space<vmem>>, vector<1x128xf32>
    %13 = vector.broadcast %12 : vector<1x128xf32> to vector<8x128xf32>
    %14 = arith.addf %11, %13 : vector<8x128xf32>
    %cst_11 = arith.constant 0.000000e+00 : f32
    %15 = vector.broadcast %cst_11 : f32 to vector<8x128xf32>
    %16 = arith.maximumf %14, %15 : vector<8x128xf32>
    %17 = arith.truncf %16 : vector<8x128xf32> to vector<8x128xbf16>
    %c0_12 = arith.constant 0 : index
    %c0_13 = arith.constant 0 : index
    %18 = vector.load %arg6[%c0_12, %c0_13] : memref<128x4xbf16, #tpu.memory_space<vmem>>, vector<128x4xbf16>
    %cst_14 = arith.constant dense<0.000000e+00> : vector<8x4xf32>
    %19 = tpu.matmul %17, %18, %cst_14 {dimension_numbers = #tpu.dot_dimension_numbers<[1], [0], [0], [1], [0, 0, 1, 1], [], []>} : vector<8x128xbf16>, vector<128x4xbf16>, vector<8x4xf32> -> vector<8x4xf32>
    %c0_15 = arith.constant 0 : index
    %c0_16 = arith.constant 0 : index
    %20 = vector.load %arg7[%c0_15, %c0_16] : memref<1x4xf32, #tpu.memory_space<vmem>>, vector<1x4xf32>
    %21 = vector.broadcast %20 : vector<1x4xf32> to vector<8x4xf32>
    %22 = arith.addf %19, %21 : vector<8x4xf32>
    %23 = math.tanh %22 : vector<8x4xf32>
    %c0_17 = arith.constant 0 : index
    %c0_18 = arith.constant 0 : index
    %24 = vector.load %arg8[%c0_17, %c0_18] : memref<8x4xf32, #tpu.memory_space<vmem>>, vector<8x4xf32>
    tpu.vector_store %arg8[%c0_17, %c0_18], %23 {strides = array<i32>} : memref<8x4xf32, #tpu.memory_space<vmem>>, vector<8x4xf32>,
    return
  }
  func.func @transform_0(%arg0: i32) -> (i32, i32) {
    %c0_i32 = arith.constant 0 : i32
    %c0_i32_0 = arith.constant 0 : i32
    return %arg0, %c0_i32 : i32, i32
  }
  func.func @transform_1(%arg0: i32) -> (i32, i32) {
    %c0_i32 = arith.constant 0 : i32
    %c0_i32_0 = arith.constant 0 : i32
    %c0_i32_1 = arith.constant 0 : i32
    return %c0_i32, %c0_i32_0 : i32, i32
  }
  func.func @transform_2(%arg0: i32) -> (i32, i32) {
    %c0_i32 = arith.constant 0 : i32
    %c0_i32_0 = arith.constant 0 : i32
    %c0_i32_1 = arith.constant 0 : i32
    return %c0_i32, %c0_i32_0 : i32, i32
  }
  func.func @transform_3(%arg0: i32) -> (i32, i32) {
    %c0_i32 = arith.constant 0 : i32
    %c0_i32_0 = arith.constant 0 : i32
    %c0_i32_1 = arith.constant 0 : i32
    return %c0_i32, %c0_i32_0 : i32, i32
  }
  func.func @transform_4(%arg0: i32) -> (i32, i32) {
    %c0_i32 = arith.constant 0 : i32
    %c0_i32_0 = arith.constant 0 : i32
    %c0_i32_1 = arith.constant 0 : i32
    return %c0_i32, %c0_i32_0 : i32, i32
  }
  func.func @transform_5(%arg0: i32) -> (i32, i32) {
    %c0_i32 = arith.constant 0 : i32
    %c0_i32_0 = arith.constant 0 : i32
    %c0_i32_1 = arith.constant 0 : i32
    return %c0_i32, %c0_i32_0 : i32, i32
  }
  func.func @transform_6(%arg0: i32) -> (i32, i32) {
    %c0_i32 = arith.constant 0 : i32
    %c0_i32_0 = arith.constant 0 : i32
    %c0_i32_1 = arith.constant 0 : i32
    return %c0_i32, %c0_i32_0 : i32, i32
  }
  func.func @transform_7(%arg0: i32) -> (i32, i32) {
    %c0_i32 = arith.constant 0 : i32
    %c0_i32_0 = arith.constant 0 : i32
    return %arg0, %c0_i32 : i32, i32
  }
}

</mosaic_0001>

<llo_original>
// kernel: actor_forward.1
$region0: #{actor_forward.1}
  #allocation0 [shape = 'u32[]', space=smem, size = 0x4, offset = 0x4, fixed_abs, tag = 'smem constant byte address 0x4 - core index']
  #allocation1 [shape = 'u32[144,128]{1,0:T(1,128)}', space=vmem, size = 0x12000, scoped, tag = 'internal scratch']
  %s0 = inlined_call_operand.vmem [shape: f32[8,16], index: 0, kind: input, shape index: {}]
  %s1 = inlined_call_operand.vmem [shape: bf16[16,128], index: 1, kind: input, shape index: {}]
  %s2 = inlined_call_operand.vmem [shape: f32[1,128], index: 2, kind: input, shape index: {}]
  %s3 = inlined_call_operand.vmem [shape: bf16[128,128], index: 3, kind: input, shape index: {}]
  %s4 = inlined_call_operand.vmem [shape: f32[1,128], index: 4, kind: input, shape index: {}]
  %s5 = inlined_call_operand.vmem [shape: bf16[128,4], index: 5, kind: input, shape index: {}]
  %s6 = inlined_call_operand.vmem [shape: f32[1,4], index: 6, kind: input, shape index: {}]
  %s7 = inlined_call_operand.vmem [shape: f32[8,4], index: 7, kind: output, shape index: {}]
  %s8 = sld [smem:[#allocation0]]
  $region38: #{actor_forward.1} parent=0
    _
  %s10 = ssub.s32 1, %s8
  %s11 = scalar_select 0, %s10, %s8
  // Predicated region
  $region2: #{actor_forward.1} parent=0 // pred_check
    _
  $region3: #{actor_forward.1} parent=0 // pred_check_branch
    %13 = sbr.rel (0) target = $region5
  $region4: #{actor_forward.1} parent=0 // pred_region
    _
  $region5: #{actor_forward.1} parent=0 // pred_fallthru
    _
  // Predicated region
  $region6: #{actor_forward.1} parent=0 // pred_check
    _
  $region7: #{actor_forward.1} parent=0 // pred_check_branch
    %15 = sbr.rel (0) target = $region9
  $region8: #{actor_forward.1} parent=0 // pred_region
    _
  $region9: #{actor_forward.1} parent=0 // pred_fallthru
    _
  // Predicated region
  $region10: #{actor_forward.1} parent=0 // pred_check
    _
  $region11: #{actor_forward.1} parent=0 // pred_check_branch
    %17 = sbr.rel (0) target = $region13
  $region12: #{actor_forward.1} parent=0 // pred_region
    _
  $region13: #{actor_forward.1} parent=0 // pred_fallthru
    _
  // Predicated region
  $region14: #{actor_forward.1} parent=0 // pred_check
    _
  $region15: #{actor_forward.1} parent=0 // pred_check_branch
    %19 = sbr.rel (0) target = $region17
  $region16: #{actor_forward.1} parent=0 // pred_region
    _
  $region17: #{actor_forward.1} parent=0 // pred_fallthru
    _
  // Predicated region
  $region18: #{actor_forward.1} parent=0 // pred_check
    _
  $region19: #{actor_forward.1} parent=0 // pred_check_branch
    %21 = sbr.rel (0) target = $region21
  $region20: #{actor_forward.1} parent=0 // pred_region
    _
  $region21: #{actor_forward.1} parent=0 // pred_fallthru
    _
  // Predicated region
  $region22: #{actor_forward.1} parent=0 // pred_check
    _
  $region23: #{actor_forward.1} parent=0 // pred_check_branch
    %23 = sbr.rel (0) target = $region25
  $region24: #{actor_forward.1} parent=0 // pred_region
    _
  $region25: #{actor_forward.1} parent=0 // pred_fallthru
    _
  // Predicated region
  $region26: #{actor_forward.1} parent=0 // pred_check
    _
  $region27: #{actor_forward.1} parent=0 // pred_check_branch
    %25 = sbr.rel (0) target = $region29
  $region28: #{actor_forward.1} parent=0 // pred_region
    _
  $region29: #{actor_forward.1} parent=0 // pred_fallthru
    _
  %v27 = vld [vmem:[%s0] sm:$0xff]
  %v28 = vpack.c.bf16 %v27, %v27
  %v29 = vld [vmem:[%s1] sm:$0xf]
  %v30 = vld [vmem:[%s1 + $0x4] sm:$0xf]
  %v31 = vld [vmem:[%s2] sm:$0x1]
  %v33 = vlaneseq
  %v34 = vshrl.u32 %v33, 7
  %v35 = vsub.s32 0, %v34
  %v36 = vrot.slane %v31, %v35
  %v40 = vunpack.c.l.b16 %v29
  %v41 = vunpack.c.l.b16 %v30
  %v42 = vpack.c.b16 %v41, %v40
  %vm44 = vcmask 130048
  %v46 = vsel %vm44, %v28, 0
  %48 = vmatprep.subr.bf16.mxu0 0
  %49 = vmatpush1.bf16.msra.mxu0 %v42
  %50 = vmatprep.subr.bf16.mxu0 0
  %51 = vmatpush1.bf16.msra.mxu0 0
  %52 = vmatprep.subr.bf16.mxu0 0
  %53 = vmatpush1.bf16.msra.mxu0 0
  %54 = vmatprep.subr.bf16.mxu0 0
  %55 = vmatpush1.bf16.msra.mxu0 0
  %56 = vmatprep.subr.bf16.mxu0 0
  %57 = vmatpush1.bf16.msra.mxu0 0
  %58 = vmatprep.subr.bf16.mxu0 0
  %59 = vmatpush1.bf16.msra.mxu0 0
  %60 = vmatprep.subr.bf16.mxu0 0
  %61 = vmatpush1.bf16.msra.mxu0 0
  %62 = vmatprep.subr.bf16.mxu0 0
  %63 = vmatpush1.bf16.msra.mxu0 0
  %64 = vmatprep.subr.bf16.mxu0 0
  %65 = vmatpush1.bf16.msra.mxu0 0
  %66 = vmatprep.subr.bf16.mxu0 0
  %67 = vmatpush1.bf16.msra.mxu0 0
  %68 = vmatprep.subr.bf16.mxu0 0
  %69 = vmatpush1.bf16.msra.mxu0 0
  %70 = vmatprep.subr.bf16.mxu0 0
  %71 = vmatpush1.bf16.msra.mxu0 0
  %72 = vmatprep.subr.bf16.mxu0 0
  %73 = vmatpush1.bf16.msra.mxu0 0
  %74 = vmatprep.subr.bf16.mxu0 0
  %75 = vmatpush1.bf16.msra.mxu0 0
  %76 = vmatprep.subr.bf16.mxu0 0
  %77 = vmatpush1.bf16.msra.mxu0 0
  %78 = vmatprep.subr.bf16.mxu0 0
  %79 = vmatpush1.bf16.msra.mxu0 0
  %80 = vmatprep.mubr.bf16.mxu0 0
  %81 = vmatmul.mubr.bf16.gmra.mrb[0].mxu0 %v46
  %v82 = vpop.f32.mrb[0].mxu0
  %v83 = vadd.f32 %v36, %v82
  %v84 = vpop.f32.mrb[0].mxu0
  %v85 = vpop.f32.mrb[0].mxu0
  %v86 = vpop.f32.mrb[0].mxu0
  %87 = vdwg.mxu0
  %v88 = vmax.f32 %v83, 0.0
  %v89 = vpack.c.bf16 %v88, %v88
  %v90 = vld [vmem:[%s3] sm:$0xf]
  %v91 = vld [vmem:[%s3 + $0x4] sm:$0xf]
  %v92 = vld [vmem:[%s3 + $0x8] sm:$0xf]
  %v93 = vld [vmem:[%s3 + $0xc] sm:$0xf]
  %v94 = vld [vmem:[%s3 + $0x10] sm:$0xf]
  %v95 = vld [vmem:[%s3 + $0x14] sm:$0xf]
  %v96 = vld [vmem:[%s3 + $0x18] sm:$0xf]
  %v97 = vld [vmem:[%s3 + $0x1c] sm:$0xf]
  %v98 = vld [vmem:[%s3 + $0x20] sm:$0xf]
  %v99 = vld [vmem:[%s3 + $0x24] sm:$0xf]
  %v100 = vld [vmem:[%s3 + $0x28] sm:$0xf]
  %v101 = vld [vmem:[%s3 + $0x2c] sm:$0xf]
  %v102 = vld [vmem:[%s3 + $0x30] sm:$0xf]
  %v103 = vld [vmem:[%s3 + $0x34] sm:$0xf]
  %v104 = vld [vmem:[%s3 + $0x38] sm:$0xf]
  %v105 = vld [vmem:[%s3 + $0x3c] sm:$0xf]
  %v106 = vld [vmem:[%s4] sm:$0x1]
  %v108 = vlaneseq
  %v109 = vshrl.u32 %v108, 7
  %v110 = vsub.s32 0, %v109
  %v111 = vrot.slane %v106, %v110
  %v129 = vunpack.c.l.b16 %v90
  %v130 = vunpack.c.l.b16 %v91
  %v131 = vunpack.c.l.b16 %v92
  %v132 = vunpack.c.l.b16 %v93
  %v133 = vunpack.c.l.b16 %v94
  %v134 = vunpack.c.l.b16 %v95
  %v135 = vunpack.c.l.b16 %v96
  %v136 = vunpack.c.l.b16 %v97
  %v137 = vunpack.c.l.b16 %v98
  %v138 = vunpack.c.l.b16 %v99
  %v139 = vunpack.c.l.b16 %v100
  %v140 = vunpack.c.l.b16 %v101
  %v141 = vunpack.c.l.b16 %v102
  %v142 = vunpack.c.l.b16 %v103
  %v143 = vunpack.c.l.b16 %v104
  %v144 = vunpack.c.l.b16 %v105
  %v145 = vpack.c.b16 %v130, %v129
  %v146 = vpack.c.b16 %v132, %v131
  %v147 = vpack.c.b16 %v134, %v133
  %v148 = vpack.c.b16 %v136, %v135
  %v149 = vpack.c.b16 %v138, %v137
  %v150 = vpack.c.b16 %v140, %v139
  %v151 = vpack.c.b16 %v142, %v141
  %v152 = vpack.c.b16 %v144, %v143
  %161 = vmatprep.subr.bf16.mxu0 0
  %162 = vmatpush1.bf16.msra.mxu0 %v145
  %163 = vmatprep.subr.bf16.mxu0 0
  %164 = vmatpush1.bf16.msra.mxu0 %v146
  %165 = vmatprep.subr.bf16.mxu0 0
  %166 = vmatpush1.bf16.msra.mxu0 %v147
  %167 = vmatprep.subr.bf16.mxu0 0
  %168 = vmatpush1.bf16.msra.mxu0 %v148
  %169 = vmatprep.subr.bf16.mxu0 0
  %170 = vmatpush1.bf16.msra.mxu0 %v149
  %171 = vmatprep.subr.bf16.mxu0 0
  %172 = vmatpush1.bf16.msra.mxu0 %v150
  %173 = vmatprep.subr.bf16.mxu0 0
  %174 = vmatpush1.bf16.msra.mxu0 %v151
  %175 = vmatprep.subr.bf16.mxu0 0
  %176 = vmatpush1.bf16.msra.mxu0 %v152
  %177 = vmatprep.subr.bf16.mxu0 0
  %178 = vmatpush1.bf16.msra.mxu0 0
  %179 = vmatprep.subr.bf16.mxu0 0
  %180 = vmatpush1.bf16.msra.mxu0 0
  %181 = vmatprep.subr.bf16.mxu0 0
  %182 = vmatpush1.bf16.msra.mxu0 0
  %183 = vmatprep.subr.bf16.mxu0 0
  %184 = vmatpush1.bf16.msra.mxu0 0
  %185 = vmatprep.subr.bf16.mxu0 0
  %186 = vmatpush1.bf16.msra.mxu0 0
  %187 = vmatprep.subr.bf16.mxu0 0
  %188 = vmatpush1.bf16.msra.mxu0 0
  %189 = vmatprep.subr.bf16.mxu0 0
  %190 = vmatpush1.bf16.msra.mxu0 0
  %191 = vmatprep.subr.bf16.mxu0 0
  %192 = vmatpush1.bf16.msra.mxu0 0
  %193 = vmatprep.mubr.bf16.mxu0 0
  %194 = vmatmul.mubr.bf16.gmra.mrb[0].mxu0 %v89
  %v195 = vpop.f32.mrb[0].mxu0
  %v196 = vadd.f32 %v111, %v195
  %v197 = vpop.f32.mrb[0].mxu0
  %v198 = vpop.f32.mrb[0].mxu0
  %v199 = vpop.f32.mrb[0].mxu0
  %200 = vdwg.mxu0
  %v201 = vmax.f32 %v196, 0.0
  %v202 = vpack.c.bf16 %v201, %v201
  %v203 = vld [vmem:[%s5] sm:$0xf]
  %v204 = vld [vmem:[%s5 + $0x4] sm:$0xf]
  %v205 = vld [vmem:[%s5 + $0x8] sm:$0xf]
  %v206 = vld [vmem:[%s5 + $0xc] sm:$0xf]
  %v207 = vld [vmem:[%s5 + $0x10] sm:$0xf]
  %v208 = vld [vmem:[%s5 + $0x14] sm:$0xf]
  %v209 = vld [vmem:[%s5 + $0x18] sm:$0xf]
  %v210 = vld [vmem:[%s5 + $0x1c] sm:$0xf]
  %v211 = vld [vmem:[%s5 + $0x20] sm:$0xf]
  %v212 = vld [vmem:[%s5 + $0x24] sm:$0xf]
  %v213 = vld [vmem:[%s5 + $0x28] sm:$0xf]
  %v214 = vld [vmem:[%s5 + $0x2c] sm:$0xf]
  %v215 = vld [vmem:[%s5 + $0x30] sm:$0xf]
  %v216 = vld [vmem:[%s5 + $0x34] sm:$0xf]
  %v217 = vld [vmem:[%s5 + $0x38] sm:$0xf]
  %v218 = vld [vmem:[%s5 + $0x3c] sm:$0xf]
  %v219 = vld [vmem:[%s6] sm:$0x1]
  %v221 = vlaneseq
  %v222 = vshrl.u32 %v221, 7
  %v223 = vsub.s32 0, %v222
  %v224 = vrot.slane %v219, %v223
  %v242 = vunpack.c.l.b16 %v203
  %v243 = vunpack.c.l.b16 %v204
  %v244 = vunpack.c.l.b16 %v205
  %v245 = vunpack.c.l.b16 %v206
  %v246 = vunpack.c.l.b16 %v207
  %v247 = vunpack.c.l.b16 %v208
  %v248 = vunpack.c.l.b16 %v209
  %v249 = vunpack.c.l.b16 %v210
  %v250 = vunpack.c.l.b16 %v211
  %v251 = vunpack.c.l.b16 %v212
  %v252 = vunpack.c.l.b16 %v213
  %v253 = vunpack.c.l.b16 %v214
  %v254 = vunpack.c.l.b16 %v215
  %v255 = vunpack.c.l.b16 %v216
  %v256 = vunpack.c.l.b16 %v217
  %v257 = vunpack.c.l.b16 %v218
  %v258 = vpack.c.b16 %v243, %v242
  %v259 = vpack.c.b16 %v245, %v244
  %v260 = vpack.c.b16 %v247, %v246
  %v261 = vpack.c.b16 %v249, %v248
  %v262 = vpack.c.b16 %v251, %v250
  %v263 = vpack.c.b16 %v253, %v252
  %v264 = vpack.c.b16 %v255, %v254
  %v265 = vpack.c.b16 %v257, %v256
  %274 = vmatprep.subr.bf16.mxu0 0
  %275 = vmatpush1.bf16.msra.mxu0 %v258
  %276 = vmatprep.subr.bf16.mxu0 0
  %277 = vmatpush1.bf16.msra.mxu0 %v259
  %278 = vmatprep.subr.bf16.mxu0 0
  %279 = vmatpush1.bf16.msra.mxu0 %v260
  %280 = vmatprep.subr.bf16.mxu0 0
  %281 = vmatpush1.bf16.msra.mxu0 %v261
  %282 = vmatprep.subr.bf16.mxu0 0
  %283 = vmatpush1.bf16.msra.mxu0 %v262
  %284 = vmatprep.subr.bf16.mxu0 0
  %285 = vmatpush1.bf16.msra.mxu0 %v263
  %286 = vmatprep.subr.bf16.mxu0 0
  %287 = vmatpush1.bf16.msra.mxu0 %v264
  %288 = vmatprep.subr.bf16.mxu0 0
  %289 = vmatpush1.bf16.msra.mxu0 %v265
  %290 = vmatprep.subr.bf16.mxu0 0
  %291 = vmatpush1.bf16.msra.mxu0 0
  %292 = vmatprep.subr.bf16.mxu0 0
  %293 = vmatpush1.bf16.msra.mxu0 0
  %294 = vmatprep.subr.bf16.mxu0 0
  %295 = vmatpush1.bf16.msra.mxu0 0
  %296 = vmatprep.subr.bf16.mxu0 0
  %297 = vmatpush1.bf16.msra.mxu0 0
  %298 = vmatprep.subr.bf16.mxu0 0
  %299 = vmatpush1.bf16.msra.mxu0 0
  %300 = vmatprep.subr.bf16.mxu0 0
  %301 = vmatpush1.bf16.msra.mxu0 0
  %302 = vmatprep.subr.bf16.mxu0 0
  %303 = vmatpush1.bf16.msra.mxu0 0
  %304 = vmatprep.subr.bf16.mxu0 0
  %305 = vmatpush1.bf16.msra.mxu0 0
  %306 = vmatprep.mubr.bf16.mxu0 0
  %307 = vmatmul.mubr.bf16.gmra.mrb[0].mxu0 %v202
  %v308 = vpop.f32.mrb[0].mxu0
  %v309 = vadd.f32 %v224, %v308
  %v310 = vpop.f32.mrb[0].mxu0
  %v311 = vpop.f32.mrb[0].mxu0
  %v312 = vpop.f32.mrb[0].mxu0
  %313 = vdwg.mxu0
  %v314 = vtanh.pop %v309
  %vm315 = vcmask 31744
  %316 = vst.msk [vmem:[%s7] sm:$0xff] %vm315, %v314
  // Predicated region
  $region30: #{actor_forward.1} parent=0 // pred_check
    _
  $region31: #{actor_forward.1} parent=0 // pred_check_branch
    %318 = sbr.rel (0) target = $region33
  $region32: #{actor_forward.1} parent=0 // pred_region
    _
  $region33: #{actor_forward.1} parent=0 // pred_fallthru
    _
  // Predicated region
  $region34: #{actor_forward.1} parent=0 // pred_check
    _
  $region35: #{actor_forward.1} parent=0 // pred_check_branch
    %320 = sbr.rel (0) target = $region37
  $region36: #{actor_forward.1} parent=0 // pred_region
    _
  $region37: #{actor_forward.1} parent=0 // pred_fallthru
    _

</llo_original>
